<compile_context>
chip_gen: v7x
topology: tpu7x:2x2x1
jax: 0.10.0
libtpu: 0.0.40
codegen_flags: <defaults>
</compile_context>

<pallas_src>
import functools

import jax
import jax.numpy as jnp
from jax.experimental import pallas as pl
from jax.experimental.pallas import tpu as pltpu

_EPS = 1e-5

# Intermediate-activation storage dtype and MXU operand dtype.  Keep f32 for
# the strict 1e-4 check against the f32 reference; set to jnp.bfloat16 for the
# HBM-traffic / MXU-throughput wins described in the header.
OUT1_DTYPE = jnp.float32
MXU_DTYPE = jnp.float32

_VMEM_LIMIT = 32 * 1024 * 1024  # explicit scoped-VMEM limit (safe on v5e/v6e/v7x)


# ---------------------------------------------------------------------------
# Kernel 1: fused BN1 + ReLU + 1x1 conv (+ BN2 statistics of its output)
#   x block     : (1, Cin, HW)   NCHW image, spatial flattened onto lanes
#   out block   : (1, C4,  HW)   lane-dense store (HW is a multiple of 128)
#   stats blocks: (1, C4, 1)     per-image sum / sum-of-squares of the output
# ---------------------------------------------------------------------------
def _bn_relu_conv1x1_kernel(x_ref, s_ref, b_ref, w_ref, o_ref, sum_ref, sq_ref):
    y = jnp.maximum(x_ref[0] * s_ref[...] + b_ref[...], 0.0)      # (Cin, HW) f32
    # MXU matmul (always); the MXU is otherwise idle in this kernel so even a
    # tiny contraction dim is free under max-of-slots.
    out = jnp.dot(w_ref[...], y.astype(MXU_DTYPE),
                  preferred_element_type=jnp.float32)             # (C4, HW) f32
    o_ref[0] = out.astype(o_ref.dtype)
    # BN2 batch statistics, accumulated in f32 so OUT1_DTYPE never affects BN2.
    sum_ref[0] = jnp.sum(out, axis=1, keepdims=True)
    sq_ref[0] = jnp.sum(out * out, axis=1, keepdims=True)


# ---------------------------------------------------------------------------
# Kernel 2: fused BN2 + ReLU + 3x3 conv (pad=1) + channel-concat with x
#   The 3x3 conv is 9 matmuls on the UNSHIFTED activations; the per-tap
#   spatial shift is a lane rotation of the small (G, HW) partial result
#   (XLU), masked by a precomputed grid-invariant boundary mask (VALU mul).
# ---------------------------------------------------------------------------
def _bn_relu_conv3x3_concat_kernel(y_ref, s_ref, b_ref, w_ref, m_ref, x_ref,
                                   o_ref, *, H, W):
    HW = H * W
    G = w_ref.shape[1]
    y = jnp.maximum(y_ref[0].astype(jnp.float32) * s_ref[...] + b_ref[...], 0.0)
    ym = y.astype(MXU_DTYPE)                                       # (C4, HW)
    wt = w_ref[...]                                                # (9, G, C4)
    masks = m_ref[...]                                             # (9, HW) f32

    acc = jnp.zeros((G, HW), jnp.float32)
    for dy in (-1, 0, 1):
        for dx in (-1, 0, 1):
            k = (dy + 1) * 3 + (dx + 1)
            shift = dy * W + dx
            # Unshifted matmul: tap weights (G, C4) against (C4, HW).
            p = jnp.dot(wt[k], ym, preferred_element_type=jnp.float32)
            if shift != 0:
                # Commuted roll: rotate the (G, HW) OUTPUT, not the (C4, HW)
                # input -> C4/G less XLU traffic.
                p = pltpu.roll(p, (-shift) % HW, 1)
            if not (dy == 0 and dx == 0):
                # Hoisted boundary mask (1.0 / 0.0), broadcast over G.
                p = p * masks[k:k + 1, :]
            acc = acc + p

    # Fused channel concat: [conv2 output ; original x].
    if G % 8 == 0:
        # Both halves start on a sublane-tile boundary -> dense split stores.
        o_ref[0, :G, :] = acc.astype(o_ref.dtype)
        o_ref[0, G:, :] = x_ref[0].astype(o_ref.dtype)
    else:
        # Single contiguous full-tile store avoids misaligned partial stores.
        full = jnp.concatenate([acc, x_ref[0].astype(jnp.float32)], axis=0)
        o_ref[0] = full.astype(o_ref.dtype)


def _make_boundary_masks(H, W):
    """Grid-invariant (9, H*W) float masks for the 9 taps of a pad-1 3x3 conv."""
    pos = jnp.arange(H * W, dtype=jnp.int32)
    hh = pos // W
    ww = pos % W
    rows = []
    for dy in (-1, 0, 1):
        for dx in (-1, 0, 1):
            m = jnp.ones((H * W,), dtype=bool)
            if dy == -1:
                m = m & (hh >= 1)
            elif dy == 1:
                m = m & (hh <= H - 2)
            if dx == -1:
                m = m & (ww >= 1)
            elif dx == 1:
                m = m & (ww <= W - 2)
            rows.append(m)
    return jnp.stack(rows).astype(jnp.float32)


# ---------------------------------------------------------------------------
# Full Bottleneck forward (NCHW in, NCHW out, exactly like the PyTorch module)
# ---------------------------------------------------------------------------
def bottleneck_forward(x_nchw, gamma1, beta1, w1_oihw, gamma2, beta2, w2_oihw,
                       eps=_EPS):
    N, Cin, H, W = x_nchw.shape
    HW = H * W
    C4 = w1_oihw.shape[0]
    G = w2_oihw.shape[0]
    x = x_nchw.reshape(N, Cin, HW)                 # free reshape, no transpose

    # --- BN1 (biased batch stats), single pass over x ------------------------
    cnt1 = jnp.float32(N * HW)
    mean1 = jnp.sum(x, axis=(0, 2)) / cnt1
    var1 = jnp.maximum(jnp.sum(x * x, axis=(0, 2)) / cnt1 - mean1 * mean1, 0.0)
    scale1 = (gamma1 / jnp.sqrt(var1 + eps)).astype(jnp.float32)
    shift1 = (beta1 - mean1 * scale1).astype(jnp.float32)

    w1 = w1_oihw[:, :, 0, 0].astype(MXU_DTYPE)     # (C4, Cin)

    out1, s_sum, s_sq = pl.pallas_call(
        _bn_relu_conv1x1_kernel,
        out_shape=(
            jax.ShapeDtypeStruct((N, C4, HW), OUT1_DTYPE),
            jax.ShapeDtypeStruct((N, C4, 1), jnp.float32),
            jax.ShapeDtypeStruct((N, C4, 1), jnp.float32),
        ),
        grid=(N,),
        in_specs=[
            pl.BlockSpec((1, Cin, HW), lambda n: (n, 0, 0)),
            pl.BlockSpec((Cin, 1), lambda n: (0, 0)),
            pl.BlockSpec((Cin, 1), lambda n: (0, 0)),
            pl.BlockSpec((C4, Cin), lambda n: (0, 0)),
        ],
        out_specs=(
            pl.BlockSpec((1, C4, HW), lambda n: (n, 0, 0)),
            pl.BlockSpec((1, C4, 1), lambda n: (n, 0, 0)),
            pl.BlockSpec((1, C4, 1), lambda n: (n, 0, 0)),
        ),
        compiler_params=pltpu.CompilerParams(
            dimension_semantics=("parallel",),
            vmem_limit_bytes=_VMEM_LIMIT),
    )(x, scale1.reshape(Cin, 1), shift1.reshape(Cin, 1), w1)

    # --- BN2 scale/shift from the fused statistics (tiny scalar math) --------
    cnt2 = jnp.float32(N * HW)
    mean2 = jnp.sum(s_sum[:, :, 0], axis=0) / cnt2                     # (C4,)
    var2 = jnp.maximum(jnp.sum(s_sq[:, :, 0], axis=0) / cnt2 - mean2 * mean2, 0.0)
    scale2 = (gamma2 / jnp.sqrt(var2 + eps)).astype(jnp.float32)
    shift2 = (beta2 - mean2 * scale2).astype(jnp.float32)

    # conv2 weights as 9 taps of shape (G, C4): tap k = (ky*3 + kx)
    w2 = jnp.transpose(w2_oihw, (2, 3, 0, 1)).reshape(9, G, C4).astype(MXU_DTYPE)
    masks = _make_boundary_masks(H, W)                                 # (9, HW)

    out = pl.pallas_call(
        functools.partial(_bn_relu_conv3x3_concat_kernel, H=H, W=W),
        out_shape=jax.ShapeDtypeStruct((N, G + Cin, HW), jnp.float32),
        grid=(N,),
        in_specs=[
            pl.BlockSpec((1, C4, HW), lambda n: (n, 0, 0)),
            pl.BlockSpec((C4, 1), lambda n: (0, 0)),
            pl.BlockSpec((C4, 1), lambda n: (0, 0)),
            pl.BlockSpec((9, G, C4), lambda n: (0, 0, 0)),
            pl.BlockSpec((9, HW), lambda n: (0, 0)),
            pl.BlockSpec((1, Cin, HW), lambda n: (n, 0, 0)),
        ],
        out_specs=pl.BlockSpec((1, G + Cin, HW), lambda n: (n, 0, 0)),
        compiler_params=pltpu.CompilerParams(
            dimension_semantics=("parallel",),
            vmem_limit_bytes=_VMEM_LIMIT),
    )(out1, scale2.reshape(C4, 1), shift2.reshape(C4, 1), w2, masks, x)

    return out.reshape(N, G + Cin, H, W)   # already NCHW, already concatenated


# ---------------------------------------------------------------------------
# Pure-JAX reference (mirrors the PyTorch module) for a correctness check
# ---------------------------------------------------------------------------
def _reference(x, gamma1, beta1, w1, gamma2, beta2, w2, eps=_EPS):
    def bn(z, g, b):
        m = z.mean(axis=(0, 2, 3), keepdims=True)
        v = ((z - m) ** 2).mean(axis=(0, 2, 3), keepdims=True)
        return (z - m) / jnp.sqrt(v + eps) * g.reshape(1, -1, 1, 1) + b.reshape(1, -1, 1, 1)

    y = jax.nn.relu(bn(x, gamma1, beta1))
    out = jax.lax.conv_general_dilated(
        y, w1, (1, 1), "VALID", dimension_numbers=("NCHW", "OIHW", "NCHW"))
    y2 = jax.nn.relu(bn(out, gamma2, beta2))
    out2 = jax.lax.conv_general_dilated(
        y2, w2, (1, 1), ((1, 1), (1, 1)), dimension_numbers=("NCHW", "OIHW", "NCHW"))
    return jnp.concatenate([out2, x], axis=1)


if __name__ == "__main__":
    key = jax.random.PRNGKey(0)
    in_planes, growth_rate = 4, 8
    N, H, W = 2, 16, 16
    ks = jax.random.split(key, 7)

    x = jax.random.normal(ks[0], (N, in_planes, H, W), jnp.float32)

    # deterministic synthetic parameters (shapes from the module's __init__)
    gamma1 = 1.0 + 0.1 * jax.random.normal(ks[1], (in_planes,), jnp.float32)
    beta1 = 0.1 * jax.random.normal(ks[2], (in_planes,), jnp.float32)
    w1 = 0.2 * jax.random.normal(
        ks[3], (4 * growth_rate, in_planes, 1, 1), jnp.float32)      # conv1.weight (OIHW)
    gamma2 = 1.0 + 0.1 * jax.random.normal(ks[4], (4 * growth_rate,), jnp.float32)
    beta2 = 0.1 * jax.random.normal(ks[5], (4 * growth_rate,), jnp.float32)
    w2 = 0.1 * jax.random.normal(
        ks[6], (growth_rate, 4 * growth_rate, 3, 3), jnp.float32)    # conv2.weight (OIHW)

    out = bottleneck_forward(x, gamma1, beta1, w1, gamma2, beta2, w2)
    out = jax.block_until_ready(out)

    ref = jax.block_until_ready(_reference(x, gamma1, beta1, w1, gamma2, beta2, w2))
    assert out.shape == (N, growth_rate + in_planes, H, W), out.shape
    assert jnp.allclose(out, ref, atol=1e-4, rtol=1e-4), float(jnp.max(jnp.abs(out - ref)))

    print("KERNEL_OK")
</pallas_src>

<mosaic_0001>
module attributes {stable_mosaic.version = 11 : i64} {
  func.func @_bn_relu_conv1x1_kernel(%arg0: i32, %arg1: memref<1x4x256xf32, #tpu.memory_space<vmem>>, %arg2: memref<4x1xf32, #tpu.memory_space<vmem>>, %arg3: memref<4x1xf32, #tpu.memory_space<vmem>>, %arg4: memref<32x4xf32, #tpu.memory_space<vmem>>, %arg5: memref<1x32x256xf32, #tpu.memory_space<vmem>>, %arg6: memref<1x32x1xf32, #tpu.memory_space<vmem>>, %arg7: memref<1x32x1xf32, #tpu.memory_space<vmem>>) attributes {dimension_semantics = [#tpu.dimension_semantics<parallel>], iteration_bounds = array<i64: 2>, scalar_prefetch = 0 : i64, scratch_operands = 0 : i64, tpu.core_type = #tpu.core_type<tc>, window_params = [{transform_indices = @transform_0, window_bounds = array<i64: 1, 4, 256>}, {pipeline_mode = #tpu.pipeline_mode<synchronous>, transform_indices = @transform_1, window_bounds = array<i64: 4, 1>}, {pipeline_mode = #tpu.pipeline_mode<synchronous>, transform_indices = @transform_2, window_bounds = array<i64: 4, 1>}, {pipeline_mode = #tpu.pipeline_mode<synchronous>, transform_indices = @transform_3, window_bounds = array<i64: 32, 4>}, {transform_indices = @transform_4, window_bounds = array<i64: 1, 32, 256>}, {transform_indices = @transform_5, window_bounds = array<i64: 1, 32, 1>}, {transform_indices = @transform_6, window_bounds = array<i64: 1, 32, 1>}]} {
    %c0 = arith.constant 0 : index
    %c0_0 = arith.constant 0 : index
    %c0_1 = arith.constant 0 : index
    %0 = vector.load %arg1[%c0, %c0_0, %c0_1] : memref<1x4x256xf32, #tpu.memory_space<vmem>>, vector<1x4x256xf32>
    %1 = vector.shape_cast %0 : vector<1x4x256xf32> to vector<4x256xf32>
    %c0_2 = arith.constant 0 : index
    %c0_3 = arith.constant 0 : index
    %2 = vector.load %arg2[%c0_2, %c0_3] : memref<4x1xf32, #tpu.memory_space<vmem>>, vector<4x1xf32>
    %3 = vector.broadcast %2 : vector<4x1xf32> to vector<4x256xf32>
    %4 = arith.mulf %1, %3 : vector<4x256xf32>
    %c0_4 = arith.constant 0 : index
    %c0_5 = arith.constant 0 : index
    %5 = vector.load %arg3[%c0_4, %c0_5] : memref<4x1xf32, #tpu.memory_space<vmem>>, vector<4x1xf32>
    %6 = vector.broadcast %5 : vector<4x1xf32> to vector<4x256xf32>
    %7 = arith.addf %4, %6 : vector<4x256xf32>
    %cst = arith.constant 0.000000e+00 : f32
    %8 = vector.broadcast %cst : f32 to vector<4x256xf32>
    %9 = arith.maximumf %7, %8 : vector<4x256xf32>
    %c0_6 = arith.constant 0 : index
    %c0_7 = arith.constant 0 : index
    %10 = vector.load %arg4[%c0_6, %c0_7] : memref<32x4xf32, #tpu.memory_space<vmem>>, vector<32x4xf32>
    %cst_8 = arith.constant dense<0.000000e+00> : vector<32x256xf32>
    %11 = tpu.matmul %10, %9, %cst_8 {dimension_numbers = #tpu.dot_dimension_numbers<[1], [0], [0], [1], [0, 0, 1, 1], [], []>} : vector<32x4xf32>, vector<4x256xf32>, vector<32x256xf32> -> vector<32x256xf32>
    %c0_9 = arith.constant 0 : index
    %c0_10 = arith.constant 0 : index
    %c0_11 = arith.constant 0 : index
    %12 = vector.load %arg5[%c0_9, %c0_10, %c0_11] : memref<1x32x256xf32, #tpu.memory_space<vmem>>, vector<1x32x256xf32>
    %13 = vector.shape_cast %12 : vector<1x32x256xf32> to vector<32x256xf32>
    %14 = vector.shape_cast %11 : vector<32x256xf32> to vector<1x32x256xf32>
    tpu.vector_store %arg5[%c0_9, %c0_10, %c0_11], %14 {strides = array<i32>} : memref<1x32x256xf32, #tpu.memory_space<vmem>>, vector<1x32x256xf32>,
    %cst_12 = arith.constant dense<0.000000e+00> : vector<32xf32>
    %15 = vector.multi_reduction <add>, %11, %cst_12 [1] : vector<32x256xf32> to vector<32xf32>
    %16 = vector.shape_cast %15 : vector<32xf32> to vector<32x1xf32>
    %c0_13 = arith.constant 0 : index
    %c0_14 = arith.constant 0 : index
    %c0_15 = arith.constant 0 : index
    %17 = vector.load %arg6[%c0_13, %c0_14, %c0_15] : memref<1x32x1xf32, #tpu.memory_space<vmem>>, vector<1x32x1xf32>
    %18 = vector.shape_cast %17 : vector<1x32x1xf32> to vector<32x1xf32>
    %19 = vector.shape_cast %16 : vector<32x1xf32> to vector<1x32x1xf32>
    tpu.vector_store %arg6[%c0_13, %c0_14, %c0_15], %19 {strides = array<i32>} : memref<1x32x1xf32, #tpu.memory_space<vmem>>, vector<1x32x1xf32>,
    %20 = arith.mulf %11, %11 : vector<32x256xf32>
    %cst_16 = arith.constant dense<0.000000e+00> : vector<32xf32>
    %21 = vector.multi_reduction <add>, %20, %cst_16 [1] : vector<32x256xf32> to vector<32xf32>
    %22 = vector.shape_cast %21 : vector<32xf32> to vector<32x1xf32>
    %c0_17 = arith.constant 0 : index
    %c0_18 = arith.constant 0 : index
    %c0_19 = arith.constant 0 : index
    %23 = vector.load %arg7[%c0_17, %c0_18, %c0_19] : memref<1x32x1xf32, #tpu.memory_space<vmem>>, vector<1x32x1xf32>
    %24 = vector.shape_cast %23 : vector<1x32x1xf32> to vector<32x1xf32>
    %25 = vector.shape_cast %22 : vector<32x1xf32> to vector<1x32x1xf32>
    tpu.vector_store %arg7[%c0_17, %c0_18, %c0_19], %25 {strides = array<i32>} : memref<1x32x1xf32, #tpu.memory_space<vmem>>, vector<1x32x1xf32>,
    return
  }
  func.func @transform_0(%arg0: i32) -> (i32, i32, i32) {
    %c0_i32 = arith.constant 0 : i32
    %c0_i32_0 = arith.constant 0 : i32
    %c0_i32_1 = arith.constant 0 : i32
    return %arg0, %c0_i32, %c0_i32_0 : i32, i32, i32
  }
  func.func @transform_1(%arg0: i32) -> (i32, i32) {
    %c0_i32 = arith.constant 0 : i32
    %c0_i32_0 = arith.constant 0 : i32
    %c0_i32_1 = arith.constant 0 : i32
    return %c0_i32, %c0_i32_0 : i32, i32
  }
  func.func @transform_2(%arg0: i32) -> (i32, i32) {
    %c0_i32 = arith.constant 0 : i32
    %c0_i32_0 = arith.constant 0 : i32
    %c0_i32_1 = arith.constant 0 : i32
    return %c0_i32, %c0_i32_0 : i32, i32
  }
  func.func @transform_3(%arg0: i32) -> (i32, i32) {
    %c0_i32 = arith.constant 0 : i32
    %c0_i32_0 = arith.constant 0 : i32
    %c0_i32_1 = arith.constant 0 : i32
    return %c0_i32, %c0_i32_0 : i32, i32
  }
  func.func @transform_4(%arg0: i32) -> (i32, i32, i32) {
    %c0_i32 = arith.constant 0 : i32
    %c0_i32_0 = arith.constant 0 : i32
    %c0_i32_1 = arith.constant 0 : i32
    return %arg0, %c0_i32, %c0_i32_0 : i32, i32, i32
  }
  func.func @transform_5(%arg0: i32) -> (i32, i32, i32) {
    %c0_i32 = arith.constant 0 : i32
    %c0_i32_0 = arith.constant 0 : i32
    %c0_i32_1 = arith.constant 0 : i32
    return %arg0, %c0_i32, %c0_i32_0 : i32, i32, i32
  }
  func.func @transform_6(%arg0: i32) -> (i32, i32, i32) {
    %c0_i32 = arith.constant 0 : i32
    %c0_i32_0 = arith.constant 0 : i32
    %c0_i32_1 = arith.constant 0 : i32
    return %arg0, %c0_i32, %c0_i32_0 : i32, i32, i32
  }
}

</mosaic_0001>

<llo_original>
// kernel: tpu_custom_call.1
$region0: #{tpu_custom_call.1}
  #allocation0 [shape = 'u32[]', space=smem, size = 0x4, offset = 0x4, fixed_abs, tag = 'smem constant byte address 0x4 - core index']
  #allocation1 [shape = 'u32[144,128]{1,0:T(1,128)}', space=vmem, size = 0x12000, scoped, tag = 'internal scratch']
  %s0 = inlined_call_operand.vmem [shape: f32[2,4,256], index: 0, kind: input, shape index: {}]
  %s1 = inlined_call_operand.vmem [shape: f32[4,1], index: 1, kind: input, shape index: {}]
  %s2 = inlined_call_operand.vmem [shape: f32[4,1], index: 2, kind: input, shape index: {}]
  %s3 = inlined_call_operand.vmem [shape: f32[32,4], index: 3, kind: input, shape index: {}]
  %s4 = inlined_call_operand.hbm [shape: f32[2,32,256], index: 4, kind: output, shape index: {0}]
  %s5 = inlined_call_operand.vmem [shape: f32[2,32,1], index: 5, kind: output, shape index: {1}]
  %s6 = inlined_call_operand.vmem [shape: f32[2,32,1], index: 6, kind: output, shape index: {2}]
  %7 = xla_tuple %s4, %s5, %s6
  %s8 = sld [smem:[#allocation0]]
  $region65: #{tpu_custom_call.1} parent=0
    _
  %s10 = ssub.s32 1, %s8
  %s11 = scalar_select 0, %s10, %s8
  $region1: #{tpu_custom_call.1} parent=0
    #allocation2 [shape = 'u8[65536]{0}', space=vmem, size = 0x10000, scoped, tag = 'output window, operand 0']
    #allocation3 [shape = 's32[2]{0}', space=sflag, size = 0x8, scoped, tag = 'scoped memory for tpu_custom_call.1']
    %12 = vsyncpa [#allocation3], 0
    %s13 = scalar_lea.sflag [#allocation3], 1
    %14 = vsyncpa %s13, 0
    loop: start=0, step=1, limit=4
    $region2: #{tpu_custom_call.1} parent=1 // loop_pre_header
      _
    $region3: #{tpu_custom_call.1} parent=1 // loop_header
      %s16 = sphi 0, %s20
      %p17 = scmp.ge.s32.totalorder %s16, 4
      %s26 = sphi 0, %s28
      %s29 = sphi 0, %s26
      %s30 = sphi 0, %s29
      %s46 = sphi 0, %s30
      %s50 = sphi 0, %s50
      %s52 = sphi 0, %s50
      %s53 = sphi 0, %s52
      %s67 = sphi 0, %s53
      %s71 = sphi 0, %s71
      %s73 = sphi 0, %s71
      %s74 = sphi 0, %s73
      %s88 = sphi 0, %s74
      %s92 = sphi 0, %s92
      %s94 = sphi 0, %s92
      %s95 = sphi 0, %s94
      %s109 = sphi 0, %s95
      %s115 = sphi 0, %s117
      %s118 = sphi 0, %s115
      %s119 = sphi 0, %s118
      %s135 = sphi 0, %s119
      %s141 = sphi 0, %s143
      %s144 = sphi 0, %s141
      %s145 = sphi 0, %s144
      %s161 = sphi 0, %s145
      %s167 = sphi 0, %s169
      %s170 = sphi 0, %s167
      %s171 = sphi 0, %s170
      %s187 = sphi 0, %s171
    $region4: #{tpu_custom_call.1} parent=1 // loop_header_branch
      %19 = sbr.rel (%p17) target = $region8
    $region5: #{tpu_custom_call.1} parent=1 // loop_body
      %s21 = ssub.s32 %s16, 1
      %s22 = ssub.s32 %s16, 2
      %s23 = sadd.s32 %s16, 1
      %s24 = ssub.s32 %s16, %s23
      %p25 = scmp.eq.s32.totalorder %s24, 0
      %s27 = sadd.s32 %s26, 1
      %s28 = scalar_select %p25, %s26, %s27
      %p31 = pneg %p25
      %p32 = scmp.eq.s32.totalorder %s16, 1
      %p33 = por %p31, %p32
      %p34 = scmp.ne.s32.totalorder %s26, %s29
      %p35 = scmp.eq.s32.totalorder %s16, 0
      %p36 = por %p34, %p35
      %p37 = scmp.ne.s32.totalorder %s26, %s29
      %p38 = scmp.eq.s32.totalorder %s21, 1
      %p39 = por %p37, %p38
      %p40 = scmp.ne.s32.totalorder %s29, %s30
      %p41 = scmp.eq.s32.totalorder %s21, 0
      %p42 = por %p40, %p41
      %p43 = scmp.ne.s32.totalorder %s29, %s30
      %p44 = scmp.eq.s32.totalorder %s22, 1
      %p45 = por %p43, %p44
      %p47 = scmp.ne.s32.totalorder %s30, %s46
      %p48 = scmp.eq.s32.totalorder %s22, 0
      %p49 = por %p47, %p48
      %s51 = sadd.s32 %s50, 1
      %p54 = scmp.eq.s32.totalorder %s16, 1
      %p55 = scmp.ne.s32.totalorder %s50, %s52
      %p56 = scmp.eq.s32.totalorder %s16, 0
      %p57 = por %p55, %p56
      %p58 = scmp.ne.s32.totalorder %s50, %s52
      %p59 = scmp.eq.s32.totalorder %s21, 1
      %p60 = por %p58, %p59
      %p61 = scmp.ne.s32.totalorder %s52, %s53
      %p62 = scmp.eq.s32.totalorder %s21, 0
      %p63 = por %p61, %p62
      %p64 = scmp.ne.s32.totalorder %s52, %s53
      %p65 = scmp.eq.s32.totalorder %s22, 1
      %p66 = por %p64, %p65
      %p68 = scmp.ne.s32.totalorder %s53, %s67
      %p69 = scmp.eq.s32.totalorder %s22, 0
      %p70 = por %p68, %p69
      %s72 = sadd.s32 %s71, 1
      %p75 = scmp.eq.s32.totalorder %s16, 1
      %p76 = scmp.ne.s32.totalorder %s71, %s73
      %p77 = scmp.eq.s32.totalorder %s16, 0
      %p78 = por %p76, %p77
      %p79 = scmp.ne.s32.totalorder %s71, %s73
      %p80 = scmp.eq.s32.totalorder %s21, 1
      %p81 = por %p79, %p80
      %p82 = scmp.ne.s32.totalorder %s73, %s74
      %p83 = scmp.eq.s32.totalorder %s21, 0
      %p84 = por %p82, %p83
      %p85 = scmp.ne.s32.totalorder %s73, %s74
      %p86 = scmp.eq.s32.totalorder %s22, 1
      %p87 = por %p85, %p86
      %p89 = scmp.ne.s32.totalorder %s74, %s88
      %p90 = scmp.eq.s32.totalorder %s22, 0
      %p91 = por %p89, %p90
      %s93 = sadd.s32 %s92, 1
      %p96 = scmp.eq.s32.totalorder %s16, 1
      %p97 = scmp.ne.s32.totalorder %s92, %s94
      %p98 = scmp.eq.s32.totalorder %s16, 0
      %p99 = por %p97, %p98
      %p100 = scmp.ne.s32.totalorder %s92, %s94
      %p101 = scmp.eq.s32.totalorder %s21, 1
      %p102 = por %p100, %p101
      %p103 = scmp.ne.s32.totalorder %s94, %s95
      %p104 = scmp.eq.s32.totalorder %s21, 0
      %p105 = por %p103, %p104
      %p106 = scmp.ne.s32.totalorder %s94, %s95
      %p107 = scmp.eq.s32.totalorder %s22, 1
      %p108 = por %p106, %p107
      %p110 = scmp.ne.s32.totalorder %s95, %s109
      %p111 = scmp.eq.s32.totalorder %s22, 0
      %p112 = por %p110, %p111
      %s113 = ssub.s32 %s16, %s23
      %p114 = scmp.eq.s32.totalorder %s113, 0
      %s116 = sadd.s32 %s115, 1
      %s117 = scalar_select %p114, %s115, %s116
      %p120 = pneg %p114
      %p121 = scmp.eq.s32.totalorder %s16, 1
      %p122 = por %p120, %p121
      %p123 = scmp.ne.s32.totalorder %s115, %s118
      %p124 = scmp.eq.s32.totalorder %s16, 0
      %p125 = por %p123, %p124
      %p126 = scmp.ne.s32.totalorder %s115, %s118
      %p127 = scmp.eq.s32.totalorder %s21, 1
      %p128 = por %p126, %p127
      %p129 = scmp.ne.s32.totalorder %s118, %s119
      %p130 = scmp.eq.s32.totalorder %s21, 0
      %p131 = por %p129, %p130
      %p132 = scmp.ne.s32.totalorder %s118, %s119
      %p133 = scmp.eq.s32.totalorder %s22, 1
      %p134 = por %p132, %p133
      %p136 = scmp.ne.s32.totalorder %s119, %s135
      %p137 = scmp.eq.s32.totalorder %s22, 0
      %p138 = por %p136, %p137
      %s139 = ssub.s32 %s16, %s23
      %p140 = scmp.eq.s32.totalorder %s139, 0
      %s142 = sadd.s32 %s141, 1
      %s143 = scalar_select %p140, %s141, %s142
      %p146 = pneg %p140
      %p147 = scmp.eq.s32.totalorder %s16, 1
      %p148 = por %p146, %p147
      %p149 = scmp.ne.s32.totalorder %s141, %s144
      %p150 = scmp.eq.s32.totalorder %s16, 0
      %p151 = por %p149, %p150
      %p152 = scmp.ne.s32.totalorder %s141, %s144
      %p153 = scmp.eq.s32.totalorder %s21, 1
      %p154 = por %p152, %p153
      %p155 = scmp.ne.s32.totalorder %s144, %s145
      %p156 = scmp.eq.s32.totalorder %s21, 0
      %p157 = por %p155, %p156
      %p158 = scmp.ne.s32.totalorder %s144, %s145
      %p159 = scmp.eq.s32.totalorder %s22, 1
      %p160 = por %p158, %p159
      %p162 = scmp.ne.s32.totalorder %s145, %s161
      %p163 = scmp.eq.s32.totalorder %s22, 0
      %p164 = por %p162, %p163
      %s165 = ssub.s32 %s16, %s23
      %p166 = scmp.eq.s32.totalorder %s165, 0
      %s168 = sadd.s32 %s167, 1
      %s169 = scalar_select %p166, %s167, %s168
      %p172 = pneg %p166
      %p173 = scmp.eq.s32.totalorder %s16, 1
      %p174 = por %p172, %p173
      %p175 = scmp.ne.s32.totalorder %s167, %s170
      %p176 = scmp.eq.s32.totalorder %s16, 0
      %p177 = por %p175, %p176
      %p178 = scmp.ne.s32.totalorder %s167, %s170
      %p179 = scmp.eq.s32.totalorder %s21, 1
      %p180 = por %p178, %p179
      %p181 = scmp.ne.s32.totalorder %s170, %s171
      %p182 = scmp.eq.s32.totalorder %s21, 0
      %p183 = por %p181, %p182
      %p184 = scmp.ne.s32.totalorder %s170, %s171
      %p185 = scmp.eq.s32.totalorder %s22, 1
      %p186 = por %p184, %p185
      %p188 = scmp.ne.s32.totalorder %s171, %s187
      %p189 = scmp.eq.s32.totalorder %s22, 0
      %p190 = por %p188, %p189
      %p191 = scmp.le.s32.totalorder 1, %s16
      %p192 = scmp.lt.s32.totalorder %s16, 3
      %p193 = pnand %p191, %p192
      %p194 = pneg %p193
      // Predicated region
      $region9: #{tpu_custom_call.1} parent=5 // pred_check
        _
      $region10: #{tpu_custom_call.1} parent=5 // pred_check_branch
        %196 = sbr.rel (%p193) target = $region12
      $region11: #{tpu_custom_call.1} parent=5 // pred_region
        %s197 = ssub.s32 %s16, 1
        // Predicated region
        $region13: #{tpu_custom_call.1} parent=11 // pred_check
          %p198 = pneg %p63
        $region14: #{tpu_custom_call.1} parent=11 // pred_check_branch
          %200 = sbr.rel (%p198) target = $region16
        $region15: #{tpu_custom_call.1} parent=11 // pred_region
          _
        $region16: #{tpu_custom_call.1} parent=11 // pred_fallthru
          _
        // Predicated region
        $region17: #{tpu_custom_call.1} parent=11 // pred_check
          %p201 = pneg %p84
        $region18: #{tpu_custom_call.1} parent=11 // pred_check_branch
          %203 = sbr.rel (%p201) target = $region20
        $region19: #{tpu_custom_call.1} parent=11 // pred_region
          _
        $region20: #{tpu_custom_call.1} parent=11 // pred_fallthru
          _
        // Predicated region
        $region21: #{tpu_custom_call.1} parent=11 // pred_check
          %p204 = pneg %p105
        $region22: #{tpu_custom_call.1} parent=11 // pred_check_branch
          %206 = sbr.rel (%p204) target = $region24
        $region23: #{tpu_custom_call.1} parent=11 // pred_region
          _
        $region24: #{tpu_custom_call.1} parent=11 // pred_fallthru
          _
      $region12: #{tpu_custom_call.1} parent=5 // pred_fallthru
        _
      %p207 = scmp.lt.s32.totalorder %s16, 2
      // Predicated region
      $region25: #{tpu_custom_call.1} parent=5 // pred_check
        %p208 = pneg %p207
      $region26: #{tpu_custom_call.1} parent=5 // pred_check_branch
        %210 = sbr.rel (%p208) target = $region28
      $region27: #{tpu_custom_call.1} parent=5 // pred_region
        // Predicated region
        $region29: #{tpu_custom_call.1} parent=27 // pred_check
          %p211 = pneg %p36
        $region30: #{tpu_custom_call.1} parent=27 // pred_check_branch
          %213 = sbr.rel (%p211) target = $region32
        $region31: #{tpu_custom_call.1} parent=27 // pred_region
          %p214 = scmp.lt.s32.totalorder %s16, 1
          %s215 = scalar_select %p214, %s16, 1
          %s216 = smul.addr %s215, 2
          %s217 = smul.addr %s216, 4
          %s218 = scalar_lea.vmem %s0, %s217
        $region32: #{tpu_custom_call.1} parent=27 // pred_fallthru
          _
      $region28: #{tpu_custom_call.1} parent=5 // pred_fallthru
        _
      %p219 = scmp.le.s32.totalorder 1, %s16
      %p220 = scmp.lt.s32.totalorder %s16, 3
      %p221 = pnand %p219, %p220
      %p222 = pneg %p221
      // Predicated region
      $region33: #{tpu_custom_call.1} parent=5 // pred_check
        _
      $region34: #{tpu_custom_call.1} parent=5 // pred_check_branch
        %224 = sbr.rel (%p221) target = $region36
      $region35: #{tpu_custom_call.1} parent=5 // pred_region
        %s225 = ssub.s32 %s16, 1
        %p226 = scmp.lt.s32.totalorder %s21, 1
        %s227 = scalar_select %p226, %s21, 1
        %s228 = smul.addr %s227, 2
        %s229 = smul.addr %s228, 4
        %s230 = scalar_lea.vmem %s0, %s229
        %p231 = pneg %p42
        %p232 = pneg %p39
        %p233 = pneg %p63
        %p234 = pneg %p60
        %p235 = pneg %p84
        %p236 = pneg %p81
        %p237 = pneg %p105
        %p238 = pneg %p102
        %p239 = pneg %p131
        %p240 = pneg %p128
        %s241 = sand.u32 %s118, 1
        %s242 = scalar_lea.sflag [#allocation3], %s241
        %s243 = sand.u32 %s118, 1
        %s244 = smul.addr %s243, 64
        %s245 = scalar_lea.vmem [#allocation2], %s244
        %p246 = pneg %p157
        %p247 = pneg %p154
        %p248 = scmp.lt.s32.totalorder %s21, 1
        %s249 = scalar_select %p248, %s21, 1
        %s250 = smul.addr %s249, 4
        %s251 = smul.addr %s250, 8
        %s252 = scalar_lea.vmem %s5, %s251
        %p253 = pneg %p183
        %p254 = pneg %p180
        %p255 = scmp.lt.s32.totalorder %s21, 1
        %s256 = scalar_select %p255, %s21, 1
        %s257 = smul.addr %s256, 4
        %s258 = smul.addr %s257, 8
        %s259 = scalar_lea.vmem %s6, %s258
        %p260 = scmp.lt.s32.totalorder %s21, 1
        %s261 = scalar_select %p260, %s21, 1
        %s262 = smul.addr %s261, 2
        %s263 = smul.addr %s262, 4
        %s264 = scalar_lea.vmem %s0, %s263
        %p265 = scmp.lt.s32.totalorder %s21, 1
        %s266 = scalar_select %p265, %s21, 1
        %s267 = smul.addr %s266, 4
        %s268 = smul.addr %s267, 8
        %s269 = scalar_lea.vmem %s5, %s268
        %p270 = scmp.lt.s32.totalorder %s21, 1
        %s271 = scalar_select %p270, %s21, 1
        %s272 = smul.addr %s271, 4
        %s273 = smul.addr %s272, 8
        %s274 = scalar_lea.vmem %s6, %s273
        %v275 = vld [vmem:[%s264] sm:$0xff]
        %v276 = vld [vmem:[%s1] sm:$0xf]
        %278 = vset.pattern.permute.xlu0 0
        %279 = vperm.xlu0 %278, %v276
        %v280 = vpop.permute.xlu0 %279
        %v282 = vunpack.c.l.s4 839922192
        %v283 = vunpack.c.0.s8 %v282
        %v284 = vlaneseq
        %v285 = vshrl.u32 %v284, 7
        %v286 = vsub.s32 %v283, %v285
        %v287 = vrot.slane %v280, %v286
        %v289 = vmul.f32 %v275, %v287
        %v290 = vld [vmem:[%s2] sm:$0xf]
        %292 = vset.pattern.permute.xlu0 0
        %293 = vperm.xlu0 %292, %v290
        %v294 = vpop.permute.xlu0 %293
        %v296 = vunpack.c.l.s4 839922192
        %v297 = vunpack.c.0.s8 %v296
        %v298 = vlaneseq
        %v299 = vshrl.u32 %v298, 7
        %v300 = vsub.s32 %v297, %v299
        %v301 = vrot.slane %v294, %v300
        %v303 = vadd.f32 %v289, %v301
        %v304 = vmax.f32 %v303, 0.0
        %v305 = vld [vmem:[%s3] sm:$0xff]
        %v306 = vld [vmem:[%s3 + $0x8] sm:$0xff]
        %v307 = vld [vmem:[%s3 + $0x10] sm:$0xff]
        %v308 = vld [vmem:[%s3 + $0x18] sm:$0xff]
        %v310 = vcombine.high %v304, %v304
        %vm311 = vcmask 31744
        %v313 = vsel %vm311, %v305, 0
        %v316 = vsel %vm311, %v306, 0
        %v319 = vsel %vm311, %v307, 0
        %v322 = vsel %vm311, %v308, 0
        %vm324 = vcmask 1043456
        %v325 = vsel %vm324, %v304, 0
        %v327 = vsel %vm324, %v310, 0
        %329 = vmatprep.subr.mxu0 %v327
        %330 = vmatpush1.msra.mxu0 %v325
        %331 = vmatprep.subr.mxu0 0.0
        %332 = vmatpush1.msra.mxu0 0.0
        %333 = vmatprep.subr.mxu0 0.0
        %334 = vmatpush1.msra.mxu0 0.0
        %335 = vmatprep.subr.mxu0 0.0
        %336 = vmatpush1.msra.mxu0 0.0
        %337 = vmatprep.subr.mxu0 0.0
        %338 = vmatpush1.msra.mxu0 0.0
        %339 = vmatprep.subr.mxu0 0.0
        %340 = vmatpush1.msra.mxu0 0.0
        %341 = vmatprep.subr.mxu0 0.0
        %342 = vmatpush1.msra.mxu0 0.0
        %343 = vmatprep.subr.mxu0 0.0
        %344 = vmatpush1.msra.mxu0 0.0
        %345 = vmatprep.subr.mxu0 0.0
        %346 = vmatpush1.msra.mxu0 0.0
        %347 = vmatprep.subr.mxu0 0.0
        %348 = vmatpush1.msra.mxu0 0.0
        %349 = vmatprep.subr.mxu0 0.0
        %350 = vmatpush1.msra.mxu0 0.0
        %351 = vmatprep.subr.mxu0 0.0
        %352 = vmatpush1.msra.mxu0 0.0
        %353 = vmatprep.subr.mxu0 0.0
        %354 = vmatpush1.msra.mxu0 0.0
        %355 = vmatprep.subr.mxu0 0.0
        %356 = vmatpush1.msra.mxu0 0.0
        %357 = vmatprep.subr.mxu0 0.0
        %358 = vmatpush1.msra.mxu0 0.0
        %359 = vmatprep.subr.mxu0 0.0
        %360 = vmatpush1.msra.mxu0 0.0
        %361 = vmatprep.subr.mxu0 0.0
        %362 = vmatpush1.msra.mxu0 0.0
        %363 = vmatprep.subr.mxu0 0.0
        %364 = vmatpush1.msra.mxu0 0.0
        %365 = vmatprep.subr.mxu0 0.0
        %366 = vmatpush1.msra.mxu0 0.0
        %367 = vmatprep.subr.mxu0 0.0
        %368 = vmatpush1.msra.mxu0 0.0
        %369 = vmatprep.subr.mxu0 0.0
        %370 = vmatpush1.msra.mxu0 0.0
        %371 = vmatprep.subr.mxu0 0.0
        %372 = vmatpush1.msra.mxu0 0.0
        %373 = vmatprep.subr.mxu0 0.0
        %374 = vmatpush1.msra.mxu0 0.0
        %375 = vmatprep.subr.mxu0 0.0
        %376 = vmatpush1.msra.mxu0 0.0
        %377 = vmatprep.subr.mxu0 0.0
        %378 = vmatpush1.msra.mxu0 0.0
        %379 = vmatprep.subr.mxu0 0.0
        %380 = vmatpush1.msra.mxu0 0.0
        %381 = vmatprep.subr.mxu0 0.0
        %382 = vmatpush1.msra.mxu0 0.0
        %383 = vmatprep.subr.mxu0 0.0
        %384 = vmatpush1.msra.mxu0 0.0
        %385 = vmatprep.subr.mxu0 0.0
        %386 = vmatpush1.msra.mxu0 0.0
        %387 = vmatprep.subr.mxu0 0.0
        %388 = vmatpush1.msra.mxu0 0.0
        %389 = vmatprep.subr.mxu0 0.0
        %390 = vmatpush1.msra.mxu0 0.0
        %391 = vmatprep.subr.mxu0 0.0
        %392 = vmatpush1.msra.mxu0 0.0
        %393 = vmatprep.mubr.f32.mxu0 0.0
        %394 = vmatmul.mubr.f32.gmra.mrb[0].mxu0 %v313
        %v395 = vpop.f32.mrb[0].mxu0
        %v396 = vadd.f32 0.0, %v395
        %v397 = vpop.f32.mrb[0].mxu0
        %v398 = vadd.f32 0.0, %v397
        %399 = vmatprep.mubr.f32.mxu0 0.0
        %400 = vmatmul.mubr.f32.gmra.mrb[0].mxu0 %v316
        %v401 = vpop.f32.mrb[0].mxu0
        %v402 = vadd.f32 0.0, %v401
        %v403 = vpop.f32.mrb[0].mxu0
        %v404 = vadd.f32 0.0, %v403
        %405 = vmatprep.mubr.f32.mxu0 0.0
        %406 = vmatmul.mubr.f32.gmra.mrb[0].mxu0 %v319
        %v407 = vpop.f32.mrb[0].mxu0
        %v408 = vadd.f32 0.0, %v407
        %v409 = vpop.f32.mrb[0].mxu0
        %v410 = vadd.f32 0.0, %v409
        %411 = vmatprep.mubr.f32.mxu0 0.0
        %412 = vmatmul.mubr.f32.gmra.mrb[0].mxu0 %v322
        %v413 = vpop.f32.mrb[0].mxu0
        %v414 = vadd.f32 0.0, %v413
        %v415 = vpop.f32.mrb[0].mxu0
        %v416 = vadd.f32 0.0, %v415
        %417 = vdwg.mxu0
        %418 = vst [vmem:[%s245] sm:$0xff] %v396
        %419 = vst [vmem:[%s245 + $0x8] sm:$0xff] %v398
        %420 = vst [vmem:[%s245 + $0x10] sm:$0xff] %v402
        %421 = vst [vmem:[%s245 + $0x18] sm:$0xff] %v404
        %422 = vst [vmem:[%s245 + $0x20] sm:$0xff] %v408
        %423 = vst [vmem:[%s245 + $0x28] sm:$0xff] %v410
        %424 = vst [vmem:[%s245 + $0x30] sm:$0xff] %v414
        %425 = vst [vmem:[%s245 + $0x38] sm:$0xff] %v416
        %v426 = vadd.f32 %v396, %v398
        %427 = vadd.xlane.f32.xlu0 %v426
        %v428 = vpop.xlane.xlu0 %427
        %v429 = vadd.f32 %v402, %v404
        %430 = vadd.xlane.f32.xlu0 %v429
        %v431 = vpop.xlane.xlu0 %430
        %v432 = vadd.f32 %v408, %v410
        %433 = vadd.xlane.f32.xlu0 %v432
        %v434 = vpop.xlane.xlu0 %433
        %v435 = vadd.f32 %v414, %v416
        %436 = vadd.xlane.f32.xlu0 %v435
        %v437 = vpop.xlane.xlu0 %436
        %vm438 = vcmask 7168
        %439 = vst.msk [vmem:[%s269] sm:$0xff] %vm438, %v428
        %440 = vst.msk [vmem:[%s269 + $0x8] sm:$0xff] %vm438, %v431
        %441 = vst.msk [vmem:[%s269 + $0x10] sm:$0xff] %vm438, %v434
        %442 = vst.msk [vmem:[%s269 + $0x18] sm:$0xff] %vm438, %v437
        %v443 = vmul.f32 %v396, %v396
        %v444 = vmul.f32 %v398, %v398
        %v445 = vmul.f32 %v402, %v402
        %v446 = vmul.f32 %v404, %v404
        %v447 = vmul.f32 %v408, %v408
        %v448 = vmul.f32 %v410, %v410
        %v449 = vmul.f32 %v414, %v414
        %v450 = vmul.f32 %v416, %v416
        %v451 = vadd.f32 %v443, %v444
        %452 = vadd.xlane.f32.xlu0 %v451
        %v453 = vpop.xlane.xlu0 %452
        %v454 = vadd.f32 %v445, %v446
        %455 = vadd.xlane.f32.xlu0 %v454
        %v456 = vpop.xlane.xlu0 %455
        %v457 = vadd.f32 %v447, %v448
        %458 = vadd.xlane.f32.xlu0 %v457
        %v459 = vpop.xlane.xlu0 %458
        %v460 = vadd.f32 %v449, %v450
        %461 = vadd.xlane.f32.xlu0 %v460
        %v462 = vpop.xlane.xlu0 %461
        %463 = vst.msk [vmem:[%s274] sm:$0xff] %vm438, %v453
        %464 = vst.msk [vmem:[%s274 + $0x8] sm:$0xff] %vm438, %v456
        %465 = vst.msk [vmem:[%s274 + $0x10] sm:$0xff] %vm438, %v459
        %466 = vst.msk [vmem:[%s274 + $0x18] sm:$0xff] %vm438, %v462
        %s467 = sand.u32 %s118, 1
        %s468 = scalar_lea.sflag [#allocation3], %s467
        %s469 = sand.u32 %s118, 1
        %s470 = smul.addr %s469, 64
        %s471 = scalar_lea.vmem [#allocation2], %s470
        %p472 = scmp.lt.s32.totalorder %s21, 1
        %s473 = scalar_select %p472, %s21, 1
        %s474 = smul.addr %s473, 4
        %s475 = smul.addr %s474, 8
        %s476 = scalar_lea.vmem %s5, %s475
        %p477 = scmp.lt.s32.totalorder %s21, 1
        %s478 = scalar_select %p477, %s21, 1
        %s479 = smul.addr %s478, 4
        %s480 = smul.addr %s479, 8
        %s481 = scalar_lea.vmem %s6, %s480
        // Predicated region
        $region37: #{tpu_custom_call.1} parent=35 // pred_check
          %p482 = pneg %p128
        $region38: #{tpu_custom_call.1} parent=35 // pred_check_branch
          %484 = sbr.rel (%p482) target = $region40
        $region39: #{tpu_custom_call.1} parent=35 // pred_region
          %s486 = ssub.s32 1024, 1024
          %487 = vsyncadd %s468, %s486
          %s488 = smul.addr %s21, 8
          %s489 = smul.addr %s488, 128
          %s490 = scalar_lea.hbm %s4, %s489
          %s491 = sshll.u32 %s471, 4
          %s492 = int_to_ptr.vmem [resolvable:$true] %s491
          %497 = dma.vmem_to_hbm [thread:$0]  %s492, 1024, %s490, %s468, 256, 256, 16
        $region40: #{tpu_custom_call.1} parent=35 // pred_fallthru
          _
        // Predicated region
        $region41: #{tpu_custom_call.1} parent=35 // pred_check
          %p498 = pneg %p154
        $region42: #{tpu_custom_call.1} parent=35 // pred_check_branch
          %500 = sbr.rel (%p498) target = $region44
        $region43: #{tpu_custom_call.1} parent=35 // pred_region
          _
        $region44: #{tpu_custom_call.1} parent=35 // pred_fallthru
          _
        // Predicated region
        $region45: #{tpu_custom_call.1} parent=35 // pred_check
          %p501 = pneg %p180
        $region46: #{tpu_custom_call.1} parent=35 // pred_check_branch
          %503 = sbr.rel (%p501) target = $region48
        $region47: #{tpu_custom_call.1} parent=35 // pred_region
          _
        $region48: #{tpu_custom_call.1} parent=35 // pred_fallthru
          _
      $region36: #{tpu_custom_call.1} parent=5 // pred_fallthru
        _
      %p504 = scmp.le.s32.totalorder 2, %s16
      // Predicated region
      $region49: #{tpu_custom_call.1} parent=5 // pred_check
        %p505 = pneg %p504
      $region50: #{tpu_custom_call.1} parent=5 // pred_check_branch
        %507 = sbr.rel (%p505) target = $region52
      $region51: #{tpu_custom_call.1} parent=5 // pred_region
        %s508 = ssub.s32 %s16, 2
        // Predicated region
        $region53: #{tpu_custom_call.1} parent=51 // pred_check
          %p509 = pneg %p134
        $region54: #{tpu_custom_call.1} parent=51 // pred_check_branch
          %511 = sbr.rel (%p509) target = $region56
        $region55: #{tpu_custom_call.1} parent=51 // pred_region
          %s512 = sand.u32 %s119, 1
          %s513 = scalar_lea.sflag [#allocation3], %s512
          %s514 = sand.u32 %s119, 1
          %s515 = smul.addr %s514, 64
          %s516 = scalar_lea.vmem [#allocation2], %s515
          %517 = dma.done %s513, 1024
        $region56: #{tpu_custom_call.1} parent=51 // pred_fallthru
          _
        // Predicated region
        $region57: #{tpu_custom_call.1} parent=51 // pred_check
          %p518 = pneg %p160
        $region58: #{tpu_custom_call.1} parent=51 // pred_check_branch
          %520 = sbr.rel (%p518) target = $region60
        $region59: #{tpu_custom_call.1} parent=51 // pred_region
          %p521 = scmp.lt.s32.totalorder %s22, 1
          %s522 = scalar_select %p521, %s22, 1
          %s523 = smul.addr %s522, 4
          %s524 = smul.addr %s523, 8
          %s525 = scalar_lea.vmem %s5, %s524
        $region60: #{tpu_custom_call.1} parent=51 // pred_fallthru
          _
        // Predicated region
        $region61: #{tpu_custom_call.1} parent=51 // pred_check
          %p526 = pneg %p186
        $region62: #{tpu_custom_call.1} parent=51 // pred_check_branch
          %528 = sbr.rel (%p526) target = $region64
        $region63: #{tpu_custom_call.1} parent=51 // pred_region
          %p529 = scmp.lt.s32.totalorder %s22, 1
          %s530 = scalar_select %p529, %s22, 1
          %s531 = smul.addr %s530, 4
          %s532 = smul.addr %s531, 8
          %s533 = scalar_lea.vmem %s6, %s532
        $region64: #{tpu_custom_call.1} parent=51 // pred_fallthru
          _
      $region52: #{tpu_custom_call.1} parent=5 // pred_fallthru
        _
    $region6: #{tpu_custom_call.1} parent=1 // loop_footer
      %s20 = sadd.s32 1, %s16
    $region7: #{tpu_custom_call.1} parent=1 // loop_footer_branch
      %15 = sbr.rel target = $region3
    $region8: #{tpu_custom_call.1} parent=1 // loop_exit
      _
    %534 = vsyncpa [#allocation3], 1
    %s535 = scalar_lea.sflag [#allocation3], 1
    %536 = vsyncpa %s535, 1

</llo_original>
